<compile_context>
chip_gen: v5e
topology: v5e:2x2
jax: 0.10.0
libtpu: 0.0.40
codegen_flags: <defaults>
</compile_context>

<pallas_src>
import functools

import jax
import jax.numpy as jnp
from jax.experimental import pallas as pl
from jax.experimental.pallas import tpu as pltpu


_VMEM = pl.BlockSpec(memory_space=pltpu.MemorySpace.VMEM)


def _f32(x):
    x = jnp.asarray(x)
    return x if x.dtype == jnp.float32 else x.astype(jnp.float32)


def _static_int(x):
    """Static Python int for label / censoring flags that drive Python branching."""
    if x is None:
        return None
    if isinstance(x, (bool, int, float)):
        return int(x)
    # TODO(synk): a device array here forces one device->host sync (same as the
    # original torch `int(tensor)`); pass Python ints to stay fully on-device.
    return int(jax.device_get(jnp.asarray(x).reshape(())))


@functools.partial(
    jax.jit,
    static_argnames=("w_nll", "w_cohort", "alpha", "eps", "temperature",
                     "label", "c_flag"))
def _fused_forward(hazards_list, S_list, Y, c, indiv, origs, cohort_feats, *,
                   w_nll, w_cohort, alpha, eps, temperature, label, c_flag):
    """Jitted arg-prep + single fused pallas_call.

    hazards_list / S_list : list of (B, K) per-head arrays (or None)
    Y : (B,) labels, c : (B,) censoring            (or None)
    indiv : (4*D,)-reshapable array, origs : list of (1,1,D) arrays
    cohort_feats : list of (r_j, D) arrays         (or None)
    Returns (weighted_nllsurv, weighted_cohort, weighted_total) 0-d f32.
    """
    f32 = jnp.float32
    has_nll = hazards_list is not None
    has_cohort = indiv is not None

    w_nll_f = float(w_nll)
    w_coh_f = float(w_cohort)
    alpha_f = float(alpha)
    eps_f = float(eps)
    inv_t = 1.0 / float(temperature)

    args, specs = [], []
    batch = 1

    # ----------------------- NLL survival inputs ----------------------------
    if has_nll:
        hz = [_f32(h) for h in hazards_list]
        ss = [_f32(s) for s in S_list]
        L = len(hz)
        hazards = jnp.concatenate(hz, axis=0)                 # (R, K), R = L*B
        S = jnp.concatenate(ss, axis=0)                       # (R, K)
        batch = int(jnp.reshape(Y, (-1,)).shape[0])
        Yv = jnp.reshape(Y, (-1,)).astype(jnp.int32)
        cv = jnp.reshape(c, (-1,)).astype(f32)
        y_col = jnp.tile(Yv, L).reshape(-1, 1)                # (R, 1) int32
        c_col = jnp.tile(cv, L).reshape(-1, 1)                # (R, 1) f32
        # TODO(synk): if R = heads*batch ever grows large, restack so R maps to
        # the 128-lane axis instead of (R, K=4) for lane-dense vregs.
        args += [hazards, S, y_col, c_col]
        specs += [_VMEM] * 4

    # ----------------------- Cohort inputs ----------------------------------
    has_inter = False
    if has_cohort:
        x = jnp.reshape(_f32(indiv), (4, -1))                 # (N=4, D)
        N, D = x.shape
        orig_cat = jax.lax.stop_gradient(
            jnp.concatenate([_f32(o) for o in origs], axis=1))
        yo = jnp.reshape(orig_cat, (-1, D))                   # (M, D)
        msk = jnp.array([[1., 1.], [0., 0.], [1., 0.], [0., 1.]], f32)  # (4, 2)
        args += [x, yo, msk]
        specs += [_VMEM] * 3

        feats = [jax.lax.stop_gradient(_f32(f)) for f in cohort_feats]
        pos_f = neg_f = None
        if c_flag == 0:
            neg_l = [f for j, f in enumerate(feats) if label != j]
            neg_f = jnp.concatenate(neg_l, axis=0) if neg_l else None
            pos_f = feats[label][:-1]
        elif label != 0:
            neg_l = [f for j, f in enumerate(feats) if label > j]
            pos_l = [f for j, f in enumerate(feats) if label <= j]
            neg_f = jnp.concatenate(neg_l, axis=0) if neg_l else None
            pos_f = jnp.concatenate(pos_l, axis=0) if pos_l else None
        # else: label == 0 and c != 0  ->  intra loss only (torch returns intra)

        if (pos_f is not None and neg_f is not None
                and pos_f.shape[0] >= 1 and neg_f.shape[0] >= 1):
            has_inter = True
            # Same broadcast requirement as torch (`indiv * feat`): rows must
            # be 1 or N; pre-broadcast so the kernel sees (N, D) for both.
            pos_b = jnp.broadcast_to(pos_f, (N, D))
            neg_b = jnp.broadcast_to(neg_f, (N, D))
            args += [pos_b, neg_b]
            specs += [_VMEM] * 2

    inv_batch = 1.0 / float(batch)

    # ----------------------------- kernel -----------------------------------
    def kernel(*refs):
        in_refs = refs[:-1]
        out_ref = refs[-1]
        idx = 0
        nll_v = jnp.zeros((1, 1), f32)
        coh_v = jnp.zeros((1, 1), f32)

        # -------- NLL survival loss (all heads stacked along rows) ----------
        if has_nll:
            h_ref, s_ref, y_ref, cc_ref = in_refs[idx:idx + 4]
            idx += 4
            h = h_ref[...]                        # (R, K)
            s = s_ref[...]                        # (R, K)
            y_col_k = y_ref[...]                  # (R, 1) int32
            c_col_k = cc_ref[...]                 # (R, 1) f32
            R, K = h.shape
            col = jax.lax.broadcasted_iota(jnp.int32, (R, K), 1)
            oh_y = (col == y_col_k).astype(f32)           # one-hot gather @ Y
            oh_ym1 = (col == (y_col_k - 1)).astype(f32)   # one-hot gather @ Y-1
            h_y = jnp.sum(oh_y * h, axis=1, keepdims=True)     # hazards[:, Y]
            s_y = jnp.sum(oh_y * s, axis=1, keepdims=True)     # S_padded[:, Y+1]
            s_prev = jnp.where(y_col_k == 0, 1.0,              # S_padded[:, Y]
                               jnp.sum(oh_ym1 * s, axis=1, keepdims=True))
            unc = -(1.0 - c_col_k) * (jnp.log(jnp.maximum(s_prev, eps_f))
                                      + jnp.log(jnp.maximum(h_y, eps_f)))
            cen = -c_col_k * jnp.log(jnp.maximum(s_y, eps_f))
            per_row = (1.0 - alpha_f) * (cen + unc) + alpha_f * unc   # (R, 1)
            # sum over heads of per-head batch mean == sum(all rows) / B
            nll_v = jnp.sum(per_row, axis=(0, 1), keepdims=True) * inv_batch

        # -------- cohort intra (cosine-sim) loss -----------------------------
        if has_cohort:
            x_ref, og_ref, m_ref = in_refs[idx:idx + 3]
            idx += 3
            xk = x_ref[...]                       # (N, D)
            yo_k = og_ref[...]                    # (M, D)
            msk_k = m_ref[...]                    # (N, M)
            N, D = xk.shape
            M = yo_k.shape[0]
            xx = jnp.sum(xk * xk, axis=1, keepdims=True)          # (N, 1)
            yy = jnp.sum(yo_k * yo_k, axis=1, keepdims=True)      # (M, 1)
            dots = jax.lax.dot_general(                           # (N, M) MXU
                xk, yo_k, (((1,), (1,)), ((), ())),
                preferred_element_type=f32)
            nrm2 = jax.lax.dot_general(                           # (N, M) outer
                xx, yy, (((1,), (1,)), ((), ())),
                preferred_element_type=f32)
            sims = dots * jax.lax.rsqrt(jnp.maximum(nrm2, 1e-16))
            term = jnp.abs(sims) * (1.0 - msk_k) - msk_k * sims
            coh_v = (jnp.sum(term, axis=(0, 1), keepdims=True)
                     * (1.0 / (N * M)) + 1.0)

            # -------- cohort inter (contrastive) loss ------------------------
            if has_inter:
                p_ref, n_ref = in_refs[idx:idx + 2]
                idx += 2
                pos_dis = xk * p_ref[...] * inv_t                 # (N, D)
                neg_dis = xk * n_ref[...] * inv_t                 # (N, D)
                # shared max-shift (overflow-safe log-sum-exp form of
                #   -log(mean(exp(pos)) / (mean(exp(pos)) + mean(exp(neg)) + 1e-10)))
                mm = jnp.maximum(
                    jnp.max(pos_dis, axis=(0, 1), keepdims=True),
                    jnp.max(neg_dis, axis=(0, 1), keepdims=True))
                scale = 1.0 / (N * D)
                pm = jnp.sum(jnp.exp(pos_dis - mm),
                             axis=(0, 1), keepdims=True) * scale
                nm = jnp.sum(jnp.exp(neg_dis - mm),
                             axis=(0, 1), keepdims=True) * scale
                eps_s = 1e-10 * jnp.exp(-mm)
                inter = jnp.log(pm + nm + eps_s) - jnp.log(pm)
                coh_v = coh_v + inter

        nll_w = nll_v * w_nll_f
        coh_w = coh_v * w_coh_f
        # single lane-dense output row: lane0=nll, lane1=cohort, lane2=total
        lane = jax.lax.broadcasted_iota(jnp.int32, (1, 128), 1)
        out_ref[...] = (jnp.where(lane == 0, nll_w, 0.0)
                        + jnp.where(lane == 1, coh_w, 0.0)
                        + jnp.where(lane == 2, nll_w + coh_w, 0.0))

    out = pl.pallas_call(
        kernel,
        out_shape=jax.ShapeDtypeStruct((1, 128), jnp.float32),
        in_specs=specs,
        out_specs=_VMEM,
    )(*args)
    return out[0, 0], out[0, 1], out[0, 2]


# ---------------------------------------------------------------------------
# LossFactory glue (mirrors Loss_factory.forward) — one fused kernel per call
# ---------------------------------------------------------------------------

class LossFactory:
    def __init__(self, loss_str, alpha=0.0, temperature=2.0):
        self.loss_collection = {}
        for loss_im in loss_str.split(','):
            tags = loss_im.split('_')
            self.loss_collection[tags[0]] = float(tags[1]) if len(tags) == 2 else 1.0
        self.alpha = alpha
        self.temperature = temperature

    def forward(self, preds, target):
        w_nll = self.loss_collection.get('nllsurv')
        w_coh = self.loss_collection.get('cohort')

        # ----- NLLSurv inputs -------------------------------------------------
        hazards_list = S_list = Y = c = None
        if w_nll is not None:
            hazards_list = [jnp.asarray(h) for h in preds['hazards']]
            S_list = [jnp.asarray(s) for s in preds['S']]
            Y = jnp.asarray(target['label']).reshape(-1)
            c = jnp.asarray(target['c']).reshape(-1)

        # ----- CohortLoss inputs (static Python branching flags) --------------
        indiv = origs = cohort_feats = None
        label_s = c_s = None
        cohort_active = False
        if w_coh is not None and 'cohort' in preds:
            indiv_in, origs_in = preds['decompose']
            cohort_in, c2 = preds['cohort']
            if c2 is not None:                 # torch returns 0 when c is None
                cohort_active = True
                indiv = jnp.asarray(indiv_in)
                origs = [jnp.asarray(o) for o in origs_in]
                cohort_feats = [jnp.asarray(f) for f in cohort_in]
                label_s = _static_int(target['label'])
                c_s = _static_int(c2)

        if hazards_list is None and indiv is None:
            # every requested loss is identically 0 — no kernel needed
            return 0.0, {name: 0.0 for name in self.loss_collection}

        nll_w, coh_w, total = _fused_forward(
            hazards_list, S_list, Y, c, indiv, origs, cohort_feats,
            w_nll=float(w_nll) if w_nll is not None else 0.0,
            w_cohort=float(w_coh) if cohort_active else 0.0,
            alpha=float(self.alpha), eps=1e-7,
            temperature=float(self.temperature),
            label=label_s, c_flag=c_s)

        ldict = {}
        for name in self.loss_collection:
            if name == 'nllsurv':
                ldict[name] = nll_w
            elif name == 'cohort':
                ldict[name] = coh_w if cohort_active else 0.0
            else:
                ldict[name] = 0.0
        return total, ldict

    __call__ = forward


# ---------------------------------------------------------------------------
# Example run
# ---------------------------------------------------------------------------

if __name__ == "__main__":
    key = jax.random.PRNGKey(0)
    ks = jax.random.split(key, 8)
    B, K, D = 1, 4, 32          # batch=1 (scalar label required by CohortLoss)

    h1 = jax.nn.sigmoid(jax.random.normal(ks[0], (B, K), jnp.float32))
    h2 = jax.nn.sigmoid(jax.random.normal(ks[1], (B, K), jnp.float32))
    S1 = jnp.cumprod(1.0 - h1, axis=1)
    S2 = jnp.cumprod(1.0 - h2, axis=1)

    indiv = jax.random.normal(ks[2], (4, D), jnp.float32)
    origs = [jax.random.normal(ks[3], (1, 1, D), jnp.float32),
             jax.random.normal(ks[4], (1, 1, D), jnp.float32)]
    cohort_feats = [jax.random.normal(ks[5], (1, D), jnp.float32),
                    jax.random.normal(ks[6], (1, D), jnp.float32)]

    preds = {
        'hazards': [h1, h2],
        'S': [S1, S2],
        'decompose': (indiv, origs),
        'cohort': (cohort_feats, 1),     # static Python c=1 -> contrastive branch
    }
    target = {
        'label': 1,                       # static Python int -> no host sync
        'c': jnp.array([1.0], jnp.float32),
    }

    factory = LossFactory("nllsurv,cohort_0.5")
    loss_sum, ldict = factory.forward(preds, target)
    jax.block_until_ready(loss_sum)
    for v in ldict.values():
        if hasattr(v, "block_until_ready"):
            v.block_until_ready()
    print("KERNEL_OK")
</pallas_src>

<mosaic_0001>
module attributes {stable_mosaic.version = 11 : i64} {
  func.func @kernel(%arg0: memref<2x4xf32, #tpu.memory_space<vmem>>, %arg1: memref<2x4xf32, #tpu.memory_space<vmem>>, %arg2: memref<2x1xi32, #tpu.memory_space<vmem>>, %arg3: memref<2x1xf32, #tpu.memory_space<vmem>>, %arg4: memref<4x32xf32, #tpu.memory_space<vmem>>, %arg5: memref<2x32xf32, #tpu.memory_space<vmem>>, %arg6: memref<4x2xf32, #tpu.memory_space<vmem>>, %arg7: memref<4x32xf32, #tpu.memory_space<vmem>>, %arg8: memref<4x32xf32, #tpu.memory_space<vmem>>, %arg9: memref<1x128xf32, #tpu.memory_space<vmem>>) attributes {dimension_semantics = [], scalar_prefetch = 0 : i64, scratch_operands = 0 : i64, tpu.core_type = #tpu.core_type<tc>} {
    %c0 = arith.constant 0 : index
    %c0_0 = arith.constant 0 : index
    %0 = vector.load %arg0[%c0, %c0_0] : memref<2x4xf32, #tpu.memory_space<vmem>>, vector<2x4xf32>
    %c0_1 = arith.constant 0 : index
    %c0_2 = arith.constant 0 : index
    %1 = vector.load %arg1[%c0_1, %c0_2] : memref<2x4xf32, #tpu.memory_space<vmem>>, vector<2x4xf32>
    %c0_3 = arith.constant 0 : index
    %c0_4 = arith.constant 0 : index
    %2 = vector.load %arg2[%c0_3, %c0_4] : memref<2x1xi32, #tpu.memory_space<vmem>>, vector<2x1xi32>
    %c0_5 = arith.constant 0 : index
    %c0_6 = arith.constant 0 : index
    %3 = vector.load %arg3[%c0_5, %c0_6] : memref<2x1xf32, #tpu.memory_space<vmem>>, vector<2x1xf32>
    %4 = tpu.iota {dimensions = array<i32: 1>} : vector<2x4xi32>
    %5 = vector.broadcast %2 : vector<2x1xi32> to vector<2x4xi32>
    %6 = arith.cmpi eq, %4, %5 : vector<2x4xi32>
    %7 = arith.extui %6 : vector<2x4xi1> to vector<2x4xi32>
    %8 = arith.sitofp %7 : vector<2x4xi32> to vector<2x4xf32>
    %c1_i32 = arith.constant 1 : i32
    %9 = vector.broadcast %c1_i32 : i32 to vector<2x1xi32>
    %10 = arith.subi %2, %9 : vector<2x1xi32>
    %11 = vector.broadcast %10 : vector<2x1xi32> to vector<2x4xi32>
    %12 = arith.cmpi eq, %4, %11 : vector<2x4xi32>
    %13 = arith.extui %12 : vector<2x4xi1> to vector<2x4xi32>
    %14 = arith.sitofp %13 : vector<2x4xi32> to vector<2x4xf32>
    %15 = arith.mulf %8, %0 : vector<2x4xf32>
    %cst = arith.constant dense<0.000000e+00> : vector<2xf32>
    %16 = vector.multi_reduction <add>, %15, %cst [1] : vector<2x4xf32> to vector<2xf32>
    %17 = vector.shape_cast %16 : vector<2xf32> to vector<2x1xf32>
    %18 = arith.mulf %8, %1 : vector<2x4xf32>
    %cst_7 = arith.constant dense<0.000000e+00> : vector<2xf32>
    %19 = vector.multi_reduction <add>, %18, %cst_7 [1] : vector<2x4xf32> to vector<2xf32>
    %20 = vector.shape_cast %19 : vector<2xf32> to vector<2x1xf32>
    %c0_i32 = arith.constant 0 : i32
    %21 = vector.broadcast %c0_i32 : i32 to vector<2x1xi32>
    %22 = arith.cmpi eq, %2, %21 : vector<2x1xi32>
    %23 = arith.mulf %14, %1 : vector<2x4xf32>
    %cst_8 = arith.constant dense<0.000000e+00> : vector<2xf32>
    %24 = vector.multi_reduction <add>, %23, %cst_8 [1] : vector<2x4xf32> to vector<2xf32>
    %25 = vector.shape_cast %24 : vector<2xf32> to vector<2x1xf32>
    %cst_9 = arith.constant 1.000000e+00 : f32
    %26 = vector.broadcast %cst_9 : f32 to vector<2x1xf32>
    %27 = arith.select %22, %26, %25 : vector<2x1xi1>, vector<2x1xf32>
    %cst_10 = arith.constant 1.000000e+00 : f32
    %28 = vector.broadcast %cst_10 : f32 to vector<2x1xf32>
    %29 = arith.subf %28, %3 : vector<2x1xf32>
    %cst_11 = arith.constant 0.000000e+00 : f32
    %30 = vector.broadcast %cst_11 : f32 to vector<2x1xf32>
    %31 = arith.subf %30, %29 : vector<2x1xf32>
    %cst_12 = arith.constant 1.000000e-07 : f32
    %32 = vector.broadcast %cst_12 : f32 to vector<2x1xf32>
    %33 = arith.maximumf %27, %32 : vector<2x1xf32>
    %34 = math.log %33 : vector<2x1xf32>
    %cst_13 = arith.constant 1.000000e-07 : f32
    %35 = vector.broadcast %cst_13 : f32 to vector<2x1xf32>
    %36 = arith.maximumf %17, %35 : vector<2x1xf32>
    %37 = math.log %36 : vector<2x1xf32>
    %38 = arith.addf %34, %37 : vector<2x1xf32>
    %39 = arith.mulf %31, %38 : vector<2x1xf32>
    %cst_14 = arith.constant 0.000000e+00 : f32
    %40 = vector.broadcast %cst_14 : f32 to vector<2x1xf32>
    %41 = arith.subf %40, %3 : vector<2x1xf32>
    %cst_15 = arith.constant 1.000000e-07 : f32
    %42 = vector.broadcast %cst_15 : f32 to vector<2x1xf32>
    %43 = arith.maximumf %20, %42 : vector<2x1xf32>
    %44 = math.log %43 : vector<2x1xf32>
    %45 = arith.mulf %41, %44 : vector<2x1xf32>
    %46 = arith.addf %45, %39 : vector<2x1xf32>
    %cst_16 = arith.constant 1.000000e+00 : f32
    %47 = vector.broadcast %cst_16 : f32 to vector<2x1xf32>
    %48 = arith.mulf %47, %46 : vector<2x1xf32>
    %cst_17 = arith.constant 0.000000e+00 : f32
    %49 = vector.broadcast %cst_17 : f32 to vector<2x1xf32>
    %50 = arith.mulf %49, %39 : vector<2x1xf32>
    %51 = arith.addf %48, %50 : vector<2x1xf32>
    %52 = vector.shape_cast %51 : vector<2x1xf32> to vector<1x2x1xf32>
    %cst_18 = arith.constant dense<0.000000e+00> : vector<1xf32>
    %53 = vector.multi_reduction <add>, %52, %cst_18 [1, 2] : vector<1x2x1xf32> to vector<1xf32>
    %54 = vector.shape_cast %53 : vector<1xf32> to vector<1x1x1xf32>
    %55 = vector.extract %54[0, 0, 0] : f32 from vector<1x1x1xf32>
    %56 = vector.broadcast %55 : f32 to vector<1x1xf32>
    %cst_19 = arith.constant 1.000000e+00 : f32
    %57 = vector.broadcast %cst_19 : f32 to vector<1x1xf32>
    %58 = arith.mulf %56, %57 : vector<1x1xf32>
    %c0_20 = arith.constant 0 : index
    %c0_21 = arith.constant 0 : index
    %59 = vector.load %arg4[%c0_20, %c0_21] : memref<4x32xf32, #tpu.memory_space<vmem>>, vector<4x32xf32>
    %c0_22 = arith.constant 0 : index
    %c0_23 = arith.constant 0 : index
    %60 = vector.load %arg5[%c0_22, %c0_23] : memref<2x32xf32, #tpu.memory_space<vmem>>, vector<2x32xf32>
    %c0_24 = arith.constant 0 : index
    %c0_25 = arith.constant 0 : index
    %61 = vector.load %arg6[%c0_24, %c0_25] : memref<4x2xf32, #tpu.memory_space<vmem>>, vector<4x2xf32>
    %62 = arith.mulf %59, %59 : vector<4x32xf32>
    %cst_26 = arith.constant dense<0.000000e+00> : vector<4xf32>
    %63 = vector.multi_reduction <add>, %62, %cst_26 [1] : vector<4x32xf32> to vector<4xf32>
    %64 = vector.shape_cast %63 : vector<4xf32> to vector<4x1xf32>
    %65 = arith.mulf %60, %60 : vector<2x32xf32>
    %cst_27 = arith.constant dense<0.000000e+00> : vector<2xf32>
    %66 = vector.multi_reduction <add>, %65, %cst_27 [1] : vector<2x32xf32> to vector<2xf32>
    %67 = vector.shape_cast %66 : vector<2xf32> to vector<2x1xf32>
    %cst_28 = arith.constant dense<0.000000e+00> : vector<4x2xf32>
    %68 = tpu.matmul %59, %60, %cst_28 {dimension_numbers = #tpu.dot_dimension_numbers<[1], [1], [0], [0], [0, 0, 1, 0], [], []>} : vector<4x32xf32>, vector<2x32xf32>, vector<4x2xf32> -> vector<4x2xf32>
    %cst_29 = arith.constant dense<0.000000e+00> : vector<4x2xf32>
    %69 = tpu.matmul %64, %67, %cst_29 {dimension_numbers = #tpu.dot_dimension_numbers<[1], [1], [0], [0], [0, 0, 1, 0], [], []>} : vector<4x1xf32>, vector<2x1xf32>, vector<4x2xf32> -> vector<4x2xf32>
    %cst_30 = arith.constant 1.000000e-16 : f32
    %70 = vector.broadcast %cst_30 : f32 to vector<4x2xf32>
    %71 = arith.maximumf %69, %70 : vector<4x2xf32>
    %72 = math.rsqrt %71 : vector<4x2xf32>
    %73 = arith.mulf %68, %72 : vector<4x2xf32>
    %74 = math.absf %73 : vector<4x2xf32>
    %cst_31 = arith.constant 1.000000e+00 : f32
    %75 = vector.broadcast %cst_31 : f32 to vector<4x2xf32>
    %76 = arith.subf %75, %61 : vector<4x2xf32>
    %77 = arith.mulf %74, %76 : vector<4x2xf32>
    %78 = arith.mulf %61, %73 : vector<4x2xf32>
    %79 = arith.subf %77, %78 : vector<4x2xf32>
    %80 = vector.shape_cast %79 : vector<4x2xf32> to vector<1x4x2xf32>
    %cst_32 = arith.constant dense<0.000000e+00> : vector<1xf32>
    %81 = vector.multi_reduction <add>, %80, %cst_32 [1, 2] : vector<1x4x2xf32> to vector<1xf32>
    %82 = vector.shape_cast %81 : vector<1xf32> to vector<1x1x1xf32>
    %83 = vector.extract %82[0, 0, 0] : f32 from vector<1x1x1xf32>
    %84 = vector.broadcast %83 : f32 to vector<1x1xf32>
    %cst_33 = arith.constant 1.250000e-01 : f32
    %85 = vector.broadcast %cst_33 : f32 to vector<1x1xf32>
    %86 = arith.mulf %84, %85 : vector<1x1xf32>
    %cst_34 = arith.constant 1.000000e+00 : f32
    %87 = vector.broadcast %cst_34 : f32 to vector<1x1xf32>
    %88 = arith.addf %86, %87 : vector<1x1xf32>
    %c0_35 = arith.constant 0 : index
    %c0_36 = arith.constant 0 : index
    %89 = vector.load %arg7[%c0_35, %c0_36] : memref<4x32xf32, #tpu.memory_space<vmem>>, vector<4x32xf32>
    %90 = arith.mulf %59, %89 : vector<4x32xf32>
    %cst_37 = arith.constant 5.000000e-01 : f32
    %91 = vector.broadcast %cst_37 : f32 to vector<4x32xf32>
    %92 = arith.mulf %90, %91 : vector<4x32xf32>
    %c0_38 = arith.constant 0 : index
    %c0_39 = arith.constant 0 : index
    %93 = vector.load %arg8[%c0_38, %c0_39] : memref<4x32xf32, #tpu.memory_space<vmem>>, vector<4x32xf32>
    %94 = arith.mulf %59, %93 : vector<4x32xf32>
    %cst_40 = arith.constant 5.000000e-01 : f32
    %95 = vector.broadcast %cst_40 : f32 to vector<4x32xf32>
    %96 = arith.mulf %94, %95 : vector<4x32xf32>
    %97 = vector.shape_cast %92 : vector<4x32xf32> to vector<1x4x32xf32>
    %cst_41 = arith.constant dense<0xFF800000> : vector<1xf32>
    %98 = vector.multi_reduction <maximumf>, %97, %cst_41 [1, 2] : vector<1x4x32xf32> to vector<1xf32>
    %99 = vector.shape_cast %98 : vector<1xf32> to vector<1x1x1xf32>
    %100 = vector.extract %99[0, 0, 0] : f32 from vector<1x1x1xf32>
    %101 = vector.broadcast %100 : f32 to vector<1x1xf32>
    %102 = vector.shape_cast %96 : vector<4x32xf32> to vector<1x4x32xf32>
    %cst_42 = arith.constant dense<0xFF800000> : vector<1xf32>
    %103 = vector.multi_reduction <maximumf>, %102, %cst_42 [1, 2] : vector<1x4x32xf32> to vector<1xf32>
    %104 = vector.shape_cast %103 : vector<1xf32> to vector<1x1x1xf32>
    %105 = vector.extract %104[0, 0, 0] : f32 from vector<1x1x1xf32>
    %106 = vector.broadcast %105 : f32 to vector<1x1xf32>
    %107 = arith.maximumf %101, %106 : vector<1x1xf32>
    %108 = vector.broadcast %107 : vector<1x1xf32> to vector<4x32xf32>
    %109 = arith.subf %92, %108 : vector<4x32xf32>
    %110 = math.exp %109 : vector<4x32xf32>
    %111 = vector.shape_cast %110 : vector<4x32xf32> to vector<1x4x32xf32>
    %cst_43 = arith.constant dense<0.000000e+00> : vector<1xf32>
    %112 = vector.multi_reduction <add>, %111, %cst_43 [1, 2] : vector<1x4x32xf32> to vector<1xf32>
    %113 = vector.shape_cast %112 : vector<1xf32> to vector<1x1x1xf32>
    %114 = vector.extract %113[0, 0, 0] : f32 from vector<1x1x1xf32>
    %115 = vector.broadcast %114 : f32 to vector<1x1xf32>
    %cst_44 = arith.constant 7.812500e-03 : f32
    %116 = vector.broadcast %cst_44 : f32 to vector<1x1xf32>
    %117 = arith.mulf %115, %116 : vector<1x1xf32>
    %118 = vector.broadcast %107 : vector<1x1xf32> to vector<4x32xf32>
    %119 = arith.subf %96, %118 : vector<4x32xf32>
    %120 = math.exp %119 : vector<4x32xf32>
    %121 = vector.shape_cast %120 : vector<4x32xf32> to vector<1x4x32xf32>
    %cst_45 = arith.constant dense<0.000000e+00> : vector<1xf32>
    %122 = vector.multi_reduction <add>, %121, %cst_45 [1, 2] : vector<1x4x32xf32> to vector<1xf32>
    %123 = vector.shape_cast %122 : vector<1xf32> to vector<1x1x1xf32>
    %124 = vector.extract %123[0, 0, 0] : f32 from vector<1x1x1xf32>
    %125 = vector.broadcast %124 : f32 to vector<1x1xf32>
    %cst_46 = arith.constant 7.812500e-03 : f32
    %126 = vector.broadcast %cst_46 : f32 to vector<1x1xf32>
    %127 = arith.mulf %125, %126 : vector<1x1xf32>
    %cst_47 = arith.constant 0.000000e+00 : f32
    %128 = vector.broadcast %cst_47 : f32 to vector<1x1xf32>
    %129 = arith.subf %128, %107 : vector<1x1xf32>
    %130 = math.exp %129 : vector<1x1xf32>
    %cst_48 = arith.constant 1.000000e-10 : f32
    %131 = vector.broadcast %cst_48 : f32 to vector<1x1xf32>
    %132 = arith.mulf %131, %130 : vector<1x1xf32>
    %133 = arith.addf %117, %127 : vector<1x1xf32>
    %134 = arith.addf %133, %132 : vector<1x1xf32>
    %135 = math.log %134 : vector<1x1xf32>
    %136 = math.log %117 : vector<1x1xf32>
    %137 = arith.subf %135, %136 : vector<1x1xf32>
    %138 = arith.addf %88, %137 : vector<1x1xf32>
    %cst_49 = arith.constant 1.000000e+00 : f32
    %139 = vector.broadcast %cst_49 : f32 to vector<1x1xf32>
    %140 = arith.mulf %58, %139 : vector<1x1xf32>
    %cst_50 = arith.constant 5.000000e-01 : f32
    %141 = vector.broadcast %cst_50 : f32 to vector<1x1xf32>
    %142 = arith.mulf %138, %141 : vector<1x1xf32>
    %143 = tpu.iota {dimensions = array<i32: 1>} : vector<1x128xi32>
    %c0_i32_51 = arith.constant 0 : i32
    %144 = vector.broadcast %c0_i32_51 : i32 to vector<1x128xi32>
    %145 = arith.cmpi eq, %143, %144 : vector<1x128xi32>
    %cst_52 = arith.constant 0.000000e+00 : f32
    %146 = vector.shape_cast %140 : vector<1x1xf32> to vector<1x1xf32>
    %147 = vector.broadcast %146 : vector<1x1xf32> to vector<1x128xf32>
    %148 = vector.broadcast %cst_52 : f32 to vector<1x128xf32>
    %149 = arith.select %145, %147, %148 : vector<1x128xi1>, vector<1x128xf32>
    %c1_i32_53 = arith.constant 1 : i32
    %150 = vector.broadcast %c1_i32_53 : i32 to vector<1x128xi32>
    %151 = arith.cmpi eq, %143, %150 : vector<1x128xi32>
    %cst_54 = arith.constant 0.000000e+00 : f32
    %152 = vector.shape_cast %142 : vector<1x1xf32> to vector<1x1xf32>
    %153 = vector.broadcast %152 : vector<1x1xf32> to vector<1x128xf32>
    %154 = vector.broadcast %cst_54 : f32 to vector<1x128xf32>
    %155 = arith.select %151, %153, %154 : vector<1x128xi1>, vector<1x128xf32>
    %156 = arith.addf %149, %155 : vector<1x128xf32>
    %c2_i32 = arith.constant 2 : i32
    %157 = vector.broadcast %c2_i32 : i32 to vector<1x128xi32>
    %158 = arith.cmpi eq, %143, %157 : vector<1x128xi32>
    %159 = arith.addf %140, %142 : vector<1x1xf32>
    %cst_55 = arith.constant 0.000000e+00 : f32
    %160 = vector.shape_cast %159 : vector<1x1xf32> to vector<1x1xf32>
    %161 = vector.broadcast %160 : vector<1x1xf32> to vector<1x128xf32>
    %162 = vector.broadcast %cst_55 : f32 to vector<1x128xf32>
    %163 = arith.select %158, %161, %162 : vector<1x128xi1>, vector<1x128xf32>
    %164 = arith.addf %156, %163 : vector<1x128xf32>
    %c0_56 = arith.constant 0 : index
    %c0_57 = arith.constant 0 : index
    %165 = vector.load %arg9[%c0_56, %c0_57] : memref<1x128xf32, #tpu.memory_space<vmem>>, vector<1x128xf32>
    tpu.vector_store %arg9[%c0_56, %c0_57], %164 {strides = array<i32>} : memref<1x128xf32, #tpu.memory_space<vmem>>, vector<1x128xf32>,
    return
  }
}

</mosaic_0001>

<llo_original>
// kernel: tile.11
$region0: #{tile.11}
  #allocation0 [shape = 's32[1]{0}', space=sflag, size = 0x4, scoped, tag = 'scoped memory for tile.11']
  %s0 = inlined_call_operand.<no memory space> [shape: s32[], index: 0, kind: input, shape index: {}]
  %s1 = inlined_call_operand.vmem [shape: s32[2,1], index: 1, kind: output, shape index: {}]
  %v2 = vstv %s0
  %3 = vst [vmem:[%s1] sm:$0x3] %v2

// kernel: tile.15
$region0: #{tile.15}
  #allocation0 [shape = 's32[1]{0}', space=sflag, size = 0x4, scoped, tag = 'scoped memory for tile.15']
  %s0 = inlined_call_operand.<no memory space> [shape: f32[], index: 0, kind: input, shape index: {}]
  %s1 = inlined_call_operand.vmem [shape: f32[2,1], index: 1, kind: output, shape index: {}]
  %v2 = vstv %s0
  %3 = vst [vmem:[%s1] sm:$0x3] %v2

// kernel: _fused_forward.1
$region0: #{_fused_forward.1}
  #allocation0 [shape = 'u32[]', space=smem, size = 0x4, offset = 0x4, fixed_abs, tag = 'smem constant byte address 0x4 - core index']
  #allocation1 [shape = 'u32[72,128]{1,0:T(1,128)}', space=vmem, size = 0x9000, scoped, tag = 'internal scratch']
  %s0 = inlined_call_operand.vmem [shape: f32[2,4], index: 0, kind: input, shape index: {}]
  %s1 = inlined_call_operand.vmem [shape: f32[2,4], index: 1, kind: input, shape index: {}]
  %s2 = inlined_call_operand.vmem [shape: s32[2,1], index: 2, kind: input, shape index: {}]
  %s3 = inlined_call_operand.vmem [shape: f32[2,1], index: 3, kind: input, shape index: {}]
  %s4 = inlined_call_operand.vmem [shape: f32[4,32], index: 4, kind: input, shape index: {}]
  %s5 = inlined_call_operand.vmem [shape: f32[2,32], index: 5, kind: input, shape index: {}]
  %s6 = inlined_call_operand.vmem [shape: f32[4,2], index: 6, kind: input, shape index: {}]
  %s7 = inlined_call_operand.vmem [shape: f32[4,32], index: 7, kind: input, shape index: {}]
  %s8 = inlined_call_operand.vmem [shape: f32[4,32], index: 8, kind: input, shape index: {}]
  %s9 = inlined_call_operand.vmem [shape: f32[1,128], index: 9, kind: output, shape index: {}]
  %s10 = sld [smem:[#allocation0]]
  $region46: #{_fused_forward.1} parent=0
    _
  %s12 = ssub.s32 1, %s10
  %s13 = scalar_select 0, %s12, %s10
  // Predicated region
  $region2: #{_fused_forward.1} parent=0 // pred_check
    _
  $region3: #{_fused_forward.1} parent=0 // pred_check_branch
    %15 = sbr.rel (0) target = $region5
  $region4: #{_fused_forward.1} parent=0 // pred_region
    _
  $region5: #{_fused_forward.1} parent=0 // pred_fallthru
    _
  // Predicated region
  $region6: #{_fused_forward.1} parent=0 // pred_check
    _
  $region7: #{_fused_forward.1} parent=0 // pred_check_branch
    %17 = sbr.rel (0) target = $region9
  $region8: #{_fused_forward.1} parent=0 // pred_region
    _
  $region9: #{_fused_forward.1} parent=0 // pred_fallthru
    _
  // Predicated region
  $region10: #{_fused_forward.1} parent=0 // pred_check
    _
  $region11: #{_fused_forward.1} parent=0 // pred_check_branch
    %19 = sbr.rel (0) target = $region13
  $region12: #{_fused_forward.1} parent=0 // pred_region
    _
  $region13: #{_fused_forward.1} parent=0 // pred_fallthru
    _
  // Predicated region
  $region14: #{_fused_forward.1} parent=0 // pred_check
    _
  $region15: #{_fused_forward.1} parent=0 // pred_check_branch
    %21 = sbr.rel (0) target = $region17
  $region16: #{_fused_forward.1} parent=0 // pred_region
    _
  $region17: #{_fused_forward.1} parent=0 // pred_fallthru
    _
  // Predicated region
  $region18: #{_fused_forward.1} parent=0 // pred_check
    _
  $region19: #{_fused_forward.1} parent=0 // pred_check_branch
    %23 = sbr.rel (0) target = $region21
  $region20: #{_fused_forward.1} parent=0 // pred_region
    _
  $region21: #{_fused_forward.1} parent=0 // pred_fallthru
    _
  // Predicated region
  $region22: #{_fused_forward.1} parent=0 // pred_check
    _
  $region23: #{_fused_forward.1} parent=0 // pred_check_branch
    %25 = sbr.rel (0) target = $region25
  $region24: #{_fused_forward.1} parent=0 // pred_region
    _
  $region25: #{_fused_forward.1} parent=0 // pred_fallthru
    _
  // Predicated region
  $region26: #{_fused_forward.1} parent=0 // pred_check
    _
  $region27: #{_fused_forward.1} parent=0 // pred_check_branch
    %27 = sbr.rel (0) target = $region29
  $region28: #{_fused_forward.1} parent=0 // pred_region
    _
  $region29: #{_fused_forward.1} parent=0 // pred_fallthru
    _
  // Predicated region
  $region30: #{_fused_forward.1} parent=0 // pred_check
    _
  $region31: #{_fused_forward.1} parent=0 // pred_check_branch
    %29 = sbr.rel (0) target = $region33
  $region32: #{_fused_forward.1} parent=0 // pred_region
    _
  $region33: #{_fused_forward.1} parent=0 // pred_fallthru
    _
  // Predicated region
  $region34: #{_fused_forward.1} parent=0 // pred_check
    _
  $region35: #{_fused_forward.1} parent=0 // pred_check_branch
    %31 = sbr.rel (0) target = $region37
  $region36: #{_fused_forward.1} parent=0 // pred_region
    _
  $region37: #{_fused_forward.1} parent=0 // pred_fallthru
    _
  %v32 = vld [vmem:[%s0] sm:$0x3]
  %v33 = vld [vmem:[%s1] sm:$0x3]
  %v34 = vld [vmem:[%s2] sm:$0x3]
  %v35 = vld [vmem:[%s3] sm:$0x3]
  %v36 = vlaneseq
  %v37 = vand.u32 %v36, 127
  %38 = vset.pattern.permute.xlu0 0
  %39 = vperm.xlu0 %38, %v34
  %v40 = vpop.permute.xlu0 %39
  %vm41 = vcmp.eq.s32.totalorder %v37, %v40
  %v42 = vsel %vm41, 1, 0
  %v43 = vcvt.s32.f32 %v42
  %v44 = vsub.s32 %v34, 1
  %45 = vset.pattern.permute.xlu0 0
  %46 = vperm.xlu0 %45, %v44
  %v47 = vpop.permute.xlu0 %46
  %vm48 = vcmp.eq.s32.totalorder %v37, %v47
  %v49 = vsel %vm48, 1, 0
  %v50 = vcvt.s32.f32 %v49
  %v51 = vmul.f32 %v43, %v32
  %vm52 = vcmask 25600
  %v53 = vsel %vm52, %v51, 0.0
  %54 = vadd.xlane.f32.xlu0 %v53
  %v55 = vpop.xlane.xlu0 %54
  %v56 = vmul.f32 %v43, %v33
  %v57 = vsel %vm52, %v56, 0.0
  %58 = vadd.xlane.f32.xlu0 %v57
  %v59 = vpop.xlane.xlu0 %58
  %vm60 = vcmp.eq.s32.totalorder %v34, 0
  %v61 = vmul.f32 %v50, %v33
  %v62 = vsel %vm52, %v61, 0.0
  %63 = vadd.xlane.f32.xlu0 %v62
  %v64 = vpop.xlane.xlu0 %63
  %v65 = vsel %vm60, 1.0, %v64
  %v66 = vsub.f32 1.0, %v35
  %v67 = vsub.f32 0.0, %v66
  %v68 = vmax.f32 %v65, 1e-07
  %v69 = vlog2.pop %v68
  %v70 = vmul.f32 %v69, 0.6931472
  %v71 = vmax.f32 %v55, 1e-07
  %v72 = vlog2.pop %v71
  %v73 = vmul.f32 %v72, 0.6931472
  %v74 = vadd.f32 %v70, %v73
  %v75 = vmul.f32 %v67, %v74
  %v76 = vsub.f32 0.0, %v35
  %v77 = vmax.f32 %v59, 1e-07
  %v78 = vlog2.pop %v77
  %v79 = vmul.f32 %v78, 0.6931472
  %v80 = vmul.f32 %v76, %v79
  %v81 = vadd.f32 %v80, %v75
  %v82 = vmul.f32 %v75, 0.0
  %v83 = vadd.f32 %v81, %v82
  %vm84 = vcmask 1024
  %v85 = vsel %vm84, %v83, 0.0
  %86 = vadd.xlane.f32.xlu0 %v85
  %v87 = vpop.xlane.xlu0 %86
  %v88 = vrot.slane %v87, 4
  %v89 = vadd.f32 %v87, %v88
  %v90 = vrot.slane %v89, 2
  %v91 = vadd.f32 %v89, %v90
  %v92 = vrot.slane %v91, 1
  %v93 = vadd.f32 %v91, %v92
  %s94 = vtos %v93
  %v95 = vstv %s94
  %v96 = vld [vmem:[%s4] sm:$0xf]
  %v97 = vld [vmem:[%s5] sm:$0x3]
  %v98 = vld [vmem:[%s6] sm:$0xf]
  %v99 = vmul.f32 %v96, %v96
  %vm100 = vcmask 257024
  %v101 = vsel %vm100, %v99, 0.0
  %102 = vadd.xlane.f32.xlu0 %v101
  %v103 = vpop.xlane.xlu0 %102
  %v104 = vmul.f32 %v97, %v97
  %vm105 = vcmask 254976
  %v106 = vsel %vm105, %v104, 0.0
  %107 = vadd.xlane.f32.xlu0 %v106
  %v108 = vpop.xlane.xlu0 %107
  %vm109 = vcmask 261120
  %v111 = vsel %vm109, %v96, 0
  %v114 = vsel %vm109, %v97, 0
  %116 = vmatpush.xpose.msra.mxu0 0.0
  %117 = vmatpush.xpose.msra.mxu0 0.0
  %118 = vmatpush.xpose.msra.mxu0 0.0
  %119 = vmatpush.xpose.msra.mxu0 0.0
  %120 = vmatpush.xpose.msra.mxu0 0.0
  %121 = vmatpush.xpose.msra.mxu0 0.0
  %122 = vmatpush.xpose.msra.mxu0 0.0
  %123 = vmatpush.xpose.msra.mxu0 0.0
  %124 = vmatpush.xpose.msra.mxu0 0.0
  %125 = vmatpush.xpose.msra.mxu0 0.0
  %126 = vmatpush.xpose.msra.mxu0 0.0
  %127 = vmatpush.xpose.msra.mxu0 0.0
  %128 = vmatpush.xpose.msra.mxu0 0.0
  %129 = vmatpush.xpose.msra.mxu0 0.0
  %130 = vmatpush.xpose.msra.mxu0 0.0
  %131 = vmatpush.xpose.msra.mxu0 %v114
  %132 = vmatmul.f32.gmra.mxu0 %v111
  %v133 = vpop.f32.mrf.mxu0
  %v134 = vadd.f32 0.0, %v133
  %135 = vdwg.mxu0
  %vm136 = vcmask 7168
  %v138 = vsel %vm136, %v103, 0
  %v141 = vsel %vm136, %v108, 0
  %143 = vmatpush.xpose.msra.mxu0 0.0
  %144 = vmatpush.xpose.msra.mxu0 0.0
  %145 = vmatpush.xpose.msra.mxu0 0.0
  %146 = vmatpush.xpose.msra.mxu0 0.0
  %147 = vmatpush.xpose.msra.mxu0 0.0
  %148 = vmatpush.xpose.msra.mxu0 0.0
  %149 = vmatpush.xpose.msra.mxu0 0.0
  %150 = vmatpush.xpose.msra.mxu0 0.0
  %151 = vmatpush.xpose.msra.mxu0 0.0
  %152 = vmatpush.xpose.msra.mxu0 0.0
  %153 = vmatpush.xpose.msra.mxu0 0.0
  %154 = vmatpush.xpose.msra.mxu0 0.0
  %155 = vmatpush.xpose.msra.mxu0 0.0
  %156 = vmatpush.xpose.msra.mxu0 0.0
  %157 = vmatpush.xpose.msra.mxu0 0.0
  %158 = vmatpush.xpose.msra.mxu0 %v141
  %159 = vmatmul.f32.gmra.mxu0 %v138
  %v160 = vpop.f32.mrf.mxu0
  %v161 = vadd.f32 0.0, %v160
  %162 = vdwg.mxu0
  %v163 = vmax.f32 %v161, 1e-16
  %v164 = vrsqrt.pop %v163
  %v165 = vmul.f32 %v164, %v163
  %v166 = vmul.f32 %v165, %v164
  %v167 = vmul.f32 0.5, %v166
  %v168 = vsub.f32 1.5, %v167
  %v169 = vmul.f32 %v164, %v168
  %vm170 = vweird.f32 %v163
  %vm171 = vweird.f32 %v164
  %vm172 = vmor %vm170, %vm171
  %v173 = vsel %vm172, %v164, %v169
  %v174 = vmul.f32 %v134, %v173
  %v175 = vand.u32 2147483647, %v174
  %v176 = vsub.f32 1.0, %v98
  %v177 = vmul.f32 %v175, %v176
  %v178 = vmul.f32 %v98, %v174
  %v179 = vsub.f32 %v177, %v178
  %vm180 = vcmask 11264
  %v181 = vsel %vm180, %v179, 0.0
  %182 = vadd.xlane.f32.xlu0 %v181
  %v183 = vpop.xlane.xlu0 %182
  %v184 = vrot.slane %v183, 4
  %v185 = vadd.f32 %v183, %v184
  %v186 = vrot.slane %v185, 2
  %v187 = vadd.f32 %v185, %v186
  %v188 = vrot.slane %v187, 1
  %v189 = vadd.f32 %v187, %v188
  %s190 = vtos %v189
  %v191 = vstv %s190
  %v192 = vmul.f32 %v191, 0.125
  %v193 = vadd.f32 %v192, 1.0
  %v194 = vld [vmem:[%s7] sm:$0xf]
  %v195 = vmul.f32 %v96, %v194
  %v196 = vmul.f32 %v195, 0.5
  %v197 = vld [vmem:[%s8] sm:$0xf]
  %v198 = vmul.f32 %v96, %v197
  %v199 = vmul.f32 %v198, 0.5
  %v200 = vsel %vm100, %v196, -inf
  %201 = vmax.xlane.f32.xlu0 %v200
  %v202 = vpop.xlane.xlu0 %201
  %v203 = vrot.slane %v202, 4
  %v204 = vmax.f32 %v202, %v203
  %v205 = vrot.slane %v204, 2
  %v206 = vmax.f32 %v204, %v205
  %v207 = vrot.slane %v206, 1
  %v208 = vmax.f32 %v206, %v207
  %s209 = vtos %v208
  %v210 = vstv %s209
  %v211 = vsel %vm100, %v199, -inf
  %212 = vmax.xlane.f32.xlu0 %v211
  %v213 = vpop.xlane.xlu0 %212
  %v214 = vrot.slane %v213, 4
  %v215 = vmax.f32 %v213, %v214
  %v216 = vrot.slane %v215, 2
  %v217 = vmax.f32 %v215, %v216
  %v218 = vrot.slane %v217, 1
  %v219 = vmax.f32 %v217, %v218
  %s220 = vtos %v219
  %v221 = vstv %s220
  %v222 = vmax.f32 %v210, %v221
  %v223 = vsub.f32 %v196, %v222
  %v224 = vmul.f32 %v223, 1.442695
  %v225 = vpow.pop %v224
  %v226 = vsel %vm100, %v225, 0.0
  %227 = vadd.xlane.f32.xlu0 %v226
  %v228 = vpop.xlane.xlu0 %227
  %v229 = vrot.slane %v228, 4
  %v230 = vadd.f32 %v228, %v229
  %v231 = vrot.slane %v230, 2
  %v232 = vadd.f32 %v230, %v231
  %v233 = vrot.slane %v232, 1
  %v234 = vadd.f32 %v232, %v233
  %s235 = vtos %v234
  %v236 = vstv %s235
  %v237 = vmul.f32 %v236, 0.0078125
  %v238 = vsub.f32 %v199, %v222
  %v239 = vmul.f32 %v238, 1.442695
  %v240 = vpow.pop %v239
  %v241 = vsel %vm100, %v240, 0.0
  %242 = vadd.xlane.f32.xlu0 %v241
  %v243 = vpop.xlane.xlu0 %242
  %v244 = vrot.slane %v243, 4
  %v245 = vadd.f32 %v243, %v244
  %v246 = vrot.slane %v245, 2
  %v247 = vadd.f32 %v245, %v246
  %v248 = vrot.slane %v247, 1
  %v249 = vadd.f32 %v247, %v248
  %s250 = vtos %v249
  %v251 = vstv %s250
  %v252 = vmul.f32 %v251, 0.0078125
  %v253 = vsub.f32 0.0, %v222
  %v254 = vmul.f32 %v253, 1.442695
  %v255 = vpow.pop %v254
  %v256 = vmul.f32 %v255, 1e-10
  %v257 = vadd.f32 %v237, %v252
  %v258 = vadd.f32 %v257, %v256
  %v259 = vlog2.pop %v258
  %v260 = vmul.f32 %v259, 0.6931472
  %v261 = vlog2.pop %v237
  %v262 = vmul.f32 %v261, 0.6931472
  %v263 = vsub.f32 %v260, %v262
  %v264 = vadd.f32 %v193, %v263
  %v265 = vmul.f32 %v264, 0.5
  %vm266 = vcmp.eq.s32.totalorder %v37, 0
  %v267 = vsel %vm266, %v95, 0.0
  %vm268 = vcmp.eq.s32.totalorder %v37, 1
  %v269 = vsel %vm268, %v265, 0.0
  %v270 = vadd.f32 %v267, %v269
  %vm271 = vcmp.eq.s32.totalorder %v37, 2
  %v272 = vadd.f32 %v95, %v265
  %v273 = vsel %vm271, %v272, 0.0
  %v274 = vadd.f32 %v270, %v273
  %275 = vst [vmem:[%s9] sm:$0x1] %v274
  // Predicated region
  $region38: #{_fused_forward.1} parent=0 // pred_check
    _
  $region39: #{_fused_forward.1} parent=0 // pred_check_branch
    %277 = sbr.rel (0) target = $region41
  $region40: #{_fused_forward.1} parent=0 // pred_region
    _
  $region41: #{_fused_forward.1} parent=0 // pred_fallthru
    _
  // Predicated region
  $region42: #{_fused_forward.1} parent=0 // pred_check
    _
  $region43: #{_fused_forward.1} parent=0 // pred_check_branch
    %279 = sbr.rel (0) target = $region45
  $region44: #{_fused_forward.1} parent=0 // pred_region
    _
  $region45: #{_fused_forward.1} parent=0 // pred_fallthru
    _

</llo_original>
